<compile_context>
chip_gen: v5e
topology: v5e:2x2
jax: 0.10.0
libtpu: 0.0.40
codegen_flags: <defaults>
</compile_context>

<pallas_src>
import math

import jax
import jax.numpy as jnp
from jax.experimental import pallas as pl
from jax.experimental.pallas import tpu as pltpu


def _ffn_kernel(x_ref, w1_ref, b1_ref, w2_ref, b2_ref, o_ref, acc_ref):
    # x_ref:  (tile_rows, d_model)
    # w1_ref: (d_model, tile_ff)     b1_ref: (1, tile_ff)
    # w2_ref: (tile_ff, tile_n)      b2_ref: (1, tile_n)
    # o_ref:  (tile_rows, tile_n)    acc_ref: (tile_rows, tile_n) f32 scratch
    f = pl.program_id(2)

    # First GEMM + bias + ReLU for this d_ff slice (MXU, f32 accumulation).
    h = jnp.dot(x_ref[...], w1_ref[...], preferred_element_type=jnp.float32)
    h = jnp.maximum(h + b1_ref[...].astype(jnp.float32), 0.0)

    # Partial contribution of this d_ff slice to the output column tile.
    p = jnp.dot(h.astype(w2_ref.dtype), w2_ref[...],
                preferred_element_type=jnp.float32)

    # Initialize the accumulator with the first partial product: saves a full
    # (tile_rows x tile_n) f32 zero-store plus one read-add per row tile.
    @pl.when(f == 0)
    def _():
        acc_ref[...] = p

    @pl.when(f > 0)
    def _():
        acc_ref[...] += p

    @pl.when(f == pl.num_programs(2) - 1)
    def _():
        y = acc_ref[...] + b2_ref[...].astype(jnp.float32)
        o_ref[...] = y.astype(o_ref.dtype)


def _round_up(a, b):
    return ((a + b - 1) // b) * b


def _cdiv(a, b):
    return (a + b - 1) // b


def _tpu_generation_and_vmem():
    """Best-effort (generation, physical VMEM bytes) query with safe fallbacks."""
    gen = None
    try:
        kind = jax.devices()[0].device_kind.lower()
        for g in (7, 6, 5, 4):
            if "v%d" % g in kind:
                gen = g
                break
    except Exception:
        pass
    vmem = None
    try:
        vmem = int(pltpu.get_tpu_info().vmem_capacity_bytes)
    except Exception:
        pass
    if gen is None:
        gen = 7 if (vmem is not None and vmem <= 80 * 1024 * 1024) else 6
    if vmem is None:
        vmem = 64 * 1024 * 1024 if gen >= 7 else 128 * 1024 * 1024
    return gen, vmem


def _select_tiles(rows, d_model, d_ff, x_isize, w_isize, o_isize,
                  gen, vmem_budget, sublane):
    """Pick (tile_rows, tile_ff, tile_n).

    Priority (roofline-driven): keep tile_rows at the per-generation weight
    reuse target, then fit VMEM by shrinking tile_ff, then by splitting the
    d_model output columns (tile_n), and only finally by shrinking tile_rows.
    """
    if gen >= 7:        # ~311 flops/byte roofline, 64 MiB VMEM, 256-wide MXU
        row_caps = (512, 384, 256, 128)
        ff_cands = (512, 256)
    elif gen == 6:      # ~640 flops/byte roofline, 128 MiB VMEM, 256-wide MXU
        row_caps = (768, 512, 384, 256, 128)
        ff_cands = (1024, 512, 256)
    else:               # v5e and older: ~240 flops/byte, 128-wide MXU
        row_caps = (384, 256, 128)
        ff_cands = (1024, 512, 256, 128)

    rows_al = _round_up(max(rows, 1), sublane)
    row_cands = sorted({min(c, rows_al) for c in row_caps}, reverse=True)

    ff_valid = [c for c in ff_cands if d_ff % c == 0] or [d_ff]
    n_valid = [d_model] + [c for c in (4096, 2048, 1024, 512, 256)
                           if c < d_model and d_model % c == 0]

    def footprint(tr, tf, tn):
        x_blk = tr * d_model * x_isize
        w1_blk = d_model * tf * w_isize
        w2_blk = tf * tn * w_isize
        b_blk = (tf + tn) * 4
        out_blk = tr * tn * o_isize
        acc = tr * tn * 4
        # BlockSpec double-buffers every streamed operand; acc is scratch.
        return 2 * (x_blk + w1_blk + w2_blk + b_blk + out_blk) + acc

    for tr in row_cands:          # keep rows large (weight reuse) ...
        for tn in n_valid:        # ... prefer un-split output columns ...
            for tf in ff_valid:   # ... shrink the ff tile first to fit VMEM.
                if footprint(tr, tf, tn) <= vmem_budget:
                    return tr, tf, tn
    # Last resort: minimum of everything (only huge models can land here).
    return row_cands[-1], ff_valid[-1], n_valid[-1]


def feed_forward(x, w1, b1, w2, b2, *, compute_dtype=None):
    """x: (..., d_model). w1: (d_model, d_ff), b1: (d_ff,),
    w2: (d_ff, d_model), b2: (d_model,).  Equivalent to
    nn.Linear(d_model,d_ff) -> ReLU -> nn.Linear(d_ff,d_model) (eval mode).

    compute_dtype: optional dtype (e.g. jnp.bfloat16) to run the GEMMs in;
    accumulation stays f32, output keeps x's original dtype."""
    orig_shape = x.shape
    d_model = orig_shape[-1]
    d_ff = w1.shape[1]
    rows = math.prod(orig_shape[:-1]) if len(orig_shape) > 1 else 1

    out_dtype = x.dtype
    if compute_dtype is not None:
        x = x.astype(compute_dtype)
        w1 = w1.astype(compute_dtype)
        w2 = w2.astype(compute_dtype)

    x2 = x.reshape(rows, d_model)
    b1r = b1.reshape(1, d_ff)
    b2r = b2.reshape(1, d_model)

    gen, vmem_cap = _tpu_generation_and_vmem()
    vmem_budget = int(vmem_cap * 0.70)                      # tile-solve budget
    vmem_limit = min(int(vmem_cap * 0.75), 100 * 1024 * 1024)

    x_isize = x2.dtype.itemsize
    w_isize = w1.dtype.itemsize
    o_isize = jnp.zeros((), out_dtype).dtype.itemsize

    # Sublane packing of the row (second-minor) dim: 8 for 4-byte dtypes,
    # 16 for 2-byte, 32 for 1-byte — keeps output stores unmasked.
    sublane = max(8, 32 // max(x_isize, 1))

    tile_rows, tile_ff, tile_n = _select_tiles(
        rows, d_model, d_ff, x_isize, w_isize, o_isize, gen, vmem_budget, sublane)
    n_tiles = d_model // tile_n

    # v7x megacore: ensure the parallel axes expose >= 2 tiles so the second
    # TensorCore has work on small-batch / decode shapes.
    rows_al = _round_up(rows, sublane)
    if gen >= 7 and n_tiles * _cdiv(rows_al, tile_rows) < 2 and rows_al >= 2 * sublane:
        tile_rows = _round_up(_cdiv(rows_al, 2), sublane)

    rows_p = _round_up(rows, tile_rows)
    if rows_p != rows:
        x2 = jnp.pad(x2, ((0, rows_p - rows), (0, 0)))

    grid = (rows_p // tile_rows, n_tiles, d_ff // tile_ff)

    out = pl.pallas_call(
        _ffn_kernel,
        out_shape=jax.ShapeDtypeStruct((rows_p, d_model), out_dtype),
        grid_spec=pltpu.PrefetchScalarGridSpec(
            num_scalar_prefetch=0,
            grid=grid,
            in_specs=[
                pl.BlockSpec((tile_rows, d_model), lambda i, n, f: (i, 0)),   # x
                pl.BlockSpec((d_model, tile_ff), lambda i, n, f: (0, f)),     # W1
                pl.BlockSpec((1, tile_ff), lambda i, n, f: (0, f)),           # b1
                pl.BlockSpec((tile_ff, tile_n), lambda i, n, f: (f, n)),      # W2
                pl.BlockSpec((1, tile_n), lambda i, n, f: (0, n)),            # b2
            ],
            out_specs=pl.BlockSpec((tile_rows, tile_n), lambda i, n, f: (i, n)),
            scratch_shapes=[pltpu.VMEM((tile_rows, tile_n), jnp.float32)],
        ),
        compiler_params=pltpu.CompilerParams(
            dimension_semantics=("parallel", "parallel", "arbitrary"),
            vmem_limit_bytes=vmem_limit,
        ),
    )(x2, w1, b1r, w2, b2r)

    if rows_p != rows:
        out = out[:rows]
    return out.reshape(orig_shape)


if __name__ == "__main__":
    key = jax.random.PRNGKey(0)
    k1, k2, k3, k4, k5 = jax.random.split(key, 5)

    batch, seq, d_model, d_ff = 2, 8, 32, 64

    x = jax.random.normal(k1, (batch, seq, d_model), dtype=jnp.float32)
    # Weights stored pre-transposed relative to nn.Linear: y = x @ W + b.
    w1 = jax.random.normal(k2, (d_model, d_ff), dtype=jnp.float32) * (
        1.0 / math.sqrt(d_model)
    )
    b1 = jax.random.normal(k3, (d_ff,), dtype=jnp.float32) * 0.1
    w2 = jax.random.normal(k4, (d_ff, d_model), dtype=jnp.float32) * (
        1.0 / math.sqrt(d_ff)
    )
    b2 = jax.random.normal(k5, (d_model,), dtype=jnp.float32) * 0.1

    out = feed_forward(x, w1, b1, w2, b2)
    out = jax.block_until_ready(out)

    # Plain-JAX reference (dropout = identity in eval mode).
    h_ref = jnp.maximum(x @ w1 + b1, 0.0)
    ref = h_ref @ w2 + b2
    assert jnp.allclose(out, ref, atol=1e-4, rtol=1e-4), "mismatch vs reference"

    print("KERNEL_OK")
</pallas_src>

<mosaic_0001>
module attributes {stable_mosaic.version = 11 : i64} {
  func.func @_ffn_kernel(%arg0: i32, %arg1: i32, %arg2: i32, %arg3: memref<16x32xf32, #tpu.memory_space<vmem>>, %arg4: memref<32x64xf32, #tpu.memory_space<vmem>>, %arg5: memref<1x64xf32, #tpu.memory_space<vmem>>, %arg6: memref<64x32xf32, #tpu.memory_space<vmem>>, %arg7: memref<1x32xf32, #tpu.memory_space<vmem>>, %arg8: memref<16x32xf32, #tpu.memory_space<vmem>>, %arg9: memref<16x32xf32, #tpu.memory_space<vmem>>) attributes {dimension_semantics = [#tpu.dimension_semantics<parallel>, #tpu.dimension_semantics<parallel>, #tpu.dimension_semantics<arbitrary>], iteration_bounds = array<i64: 1, 1, 1>, scalar_prefetch = 0 : i64, scratch_operands = 1 : i64, tpu.core_type = #tpu.core_type<tc>, window_params = [{transform_indices = @transform_0, window_bounds = array<i64: 16, 32>}, {transform_indices = @transform_1, window_bounds = array<i64: 32, 64>}, {transform_indices = @transform_2, window_bounds = array<i64: 1, 64>}, {transform_indices = @transform_3, window_bounds = array<i64: 64, 32>}, {transform_indices = @transform_4, window_bounds = array<i64: 1, 32>}, {transform_indices = @transform_5, window_bounds = array<i64: 16, 32>}]} {
    %c0 = arith.constant 0 : index
    %c0_0 = arith.constant 0 : index
    %0 = vector.load %arg3[%c0, %c0_0] : memref<16x32xf32, #tpu.memory_space<vmem>>, vector<16x32xf32>
    %c0_1 = arith.constant 0 : index
    %c0_2 = arith.constant 0 : index
    %1 = vector.load %arg4[%c0_1, %c0_2] : memref<32x64xf32, #tpu.memory_space<vmem>>, vector<32x64xf32>
    %cst = arith.constant dense<0.000000e+00> : vector<16x64xf32>
    %2 = tpu.matmul %0, %1, %cst {dimension_numbers = #tpu.dot_dimension_numbers<[1], [0], [0], [1], [0, 0, 1, 1], [], []>} : vector<16x32xf32>, vector<32x64xf32>, vector<16x64xf32> -> vector<16x64xf32>
    %c0_3 = arith.constant 0 : index
    %c0_4 = arith.constant 0 : index
    %3 = vector.load %arg5[%c0_3, %c0_4] : memref<1x64xf32, #tpu.memory_space<vmem>>, vector<1x64xf32>
    %4 = vector.broadcast %3 : vector<1x64xf32> to vector<16x64xf32>
    %5 = arith.addf %2, %4 : vector<16x64xf32>
    %cst_5 = arith.constant 0.000000e+00 : f32
    %6 = vector.broadcast %cst_5 : f32 to vector<16x64xf32>
    %7 = arith.maximumf %5, %6 : vector<16x64xf32>
    %c0_6 = arith.constant 0 : index
    %c0_7 = arith.constant 0 : index
    %8 = vector.load %arg6[%c0_6, %c0_7] : memref<64x32xf32, #tpu.memory_space<vmem>>, vector<64x32xf32>
    %cst_8 = arith.constant dense<0.000000e+00> : vector<16x32xf32>
    %9 = tpu.matmul %7, %8, %cst_8 {dimension_numbers = #tpu.dot_dimension_numbers<[1], [0], [0], [1], [0, 0, 1, 1], [], []>} : vector<16x64xf32>, vector<64x32xf32>, vector<16x32xf32> -> vector<16x32xf32>
    %c0_i32 = arith.constant 0 : i32
    %10 = arith.cmpi eq, %arg2, %c0_i32 : i32
    %11 = arith.extui %10 : i1 to i32
    %c0_i32_9 = arith.constant 0 : i32
    %12 = arith.cmpi ne, %11, %c0_i32_9 : i32
    scf.if %12 {
      %c0_14 = arith.constant 0 : index
      %c0_15 = arith.constant 0 : index
      %19 = vector.load %arg9[%c0_14, %c0_15] : memref<16x32xf32, #tpu.memory_space<vmem>>, vector<16x32xf32>
      tpu.vector_store %arg9[%c0_14, %c0_15], %9 {strides = array<i32>} : memref<16x32xf32, #tpu.memory_space<vmem>>, vector<16x32xf32>,
    } else {
    }
    %c0_i32_10 = arith.constant 0 : i32
    %13 = arith.cmpi sgt, %arg2, %c0_i32_10 : i32
    %14 = arith.extui %13 : i1 to i32
    %c0_i32_11 = arith.constant 0 : i32
    %15 = arith.cmpi ne, %14, %c0_i32_11 : i32
    scf.if %15 {
      %c0_14 = arith.constant 0 : index
      %c0_15 = arith.constant 0 : index
      %19 = vector.load %arg9[%c0_14, %c0_15] : memref<16x32xf32, #tpu.memory_space<vmem>>, vector<16x32xf32>
      %20 = arith.addf %19, %9 : vector<16x32xf32>
      %c0_16 = arith.constant 0 : index
      %c0_17 = arith.constant 0 : index
      %21 = vector.load %arg9[%c0_16, %c0_17] : memref<16x32xf32, #tpu.memory_space<vmem>>, vector<16x32xf32>
      tpu.vector_store %arg9[%c0_16, %c0_17], %20 {strides = array<i32>} : memref<16x32xf32, #tpu.memory_space<vmem>>, vector<16x32xf32>,
    } else {
    }
    %c0_i32_12 = arith.constant 0 : i32
    %16 = arith.cmpi eq, %arg2, %c0_i32_12 : i32
    %17 = arith.extui %16 : i1 to i32
    %c0_i32_13 = arith.constant 0 : i32
    %18 = arith.cmpi ne, %17, %c0_i32_13 : i32
    scf.if %18 {
      %c0_14 = arith.constant 0 : index
      %c0_15 = arith.constant 0 : index
      %19 = vector.load %arg9[%c0_14, %c0_15] : memref<16x32xf32, #tpu.memory_space<vmem>>, vector<16x32xf32>
      %c0_16 = arith.constant 0 : index
      %c0_17 = arith.constant 0 : index
      %20 = vector.load %arg7[%c0_16, %c0_17] : memref<1x32xf32, #tpu.memory_space<vmem>>, vector<1x32xf32>
      %21 = vector.broadcast %20 : vector<1x32xf32> to vector<16x32xf32>
      %22 = arith.addf %19, %21 : vector<16x32xf32>
      %c0_18 = arith.constant 0 : index
      %c0_19 = arith.constant 0 : index
      %23 = vector.load %arg8[%c0_18, %c0_19] : memref<16x32xf32, #tpu.memory_space<vmem>>, vector<16x32xf32>
      tpu.vector_store %arg8[%c0_18, %c0_19], %22 {strides = array<i32>} : memref<16x32xf32, #tpu.memory_space<vmem>>, vector<16x32xf32>,
    } else {
    }
    return
  }
  func.func @transform_0(%arg0: i32, %arg1: i32, %arg2: i32) -> (i32, i32) {
    %c0_i32 = arith.constant 0 : i32
    %c0_i32_0 = arith.constant 0 : i32
    return %arg0, %c0_i32 : i32, i32
  }
  func.func @transform_1(%arg0: i32, %arg1: i32, %arg2: i32) -> (i32, i32) {
    %c0_i32 = arith.constant 0 : i32
    %c0_i32_0 = arith.constant 0 : i32
    return %c0_i32, %arg2 : i32, i32
  }
  func.func @transform_2(%arg0: i32, %arg1: i32, %arg2: i32) -> (i32, i32) {
    %c0_i32 = arith.constant 0 : i32
    %c0_i32_0 = arith.constant 0 : i32
    return %c0_i32, %arg2 : i32, i32
  }
  func.func @transform_3(%arg0: i32, %arg1: i32, %arg2: i32) -> (i32, i32) {
    %c0_i32 = arith.constant 0 : i32
    return %arg2, %arg1 : i32, i32
  }
  func.func @transform_4(%arg0: i32, %arg1: i32, %arg2: i32) -> (i32, i32) {
    %c0_i32 = arith.constant 0 : i32
    %c0_i32_0 = arith.constant 0 : i32
    return %c0_i32, %arg1 : i32, i32
  }
  func.func @transform_5(%arg0: i32, %arg1: i32, %arg2: i32) -> (i32, i32) {
    %c0_i32 = arith.constant 0 : i32
    return %arg0, %arg1 : i32, i32
  }
}

</mosaic_0001>

<llo_original>
// kernel: tpu_custom_call.1
$region0: #{tpu_custom_call.1}
  #allocation0 [shape = 'u32[]', space=smem, size = 0x4, offset = 0x4, fixed_abs, tag = 'smem constant byte address 0x4 - core index']
  #allocation1 [shape = 'u32[72,128]{1,0:T(1,128)}', space=vmem, size = 0x9000, scoped, tag = 'internal scratch']
  #allocation2 [shape = 'f32[16,32]{1,0:T(8,128)}', space=vmem, size = 0x2000, scoped, tag = 'scratch operand']
  %s0 = inlined_call_operand.vmem [shape: f32[16,32], index: 0, kind: input, shape index: {}]
  %s1 = inlined_call_operand.vmem [shape: f32[32,64], index: 1, kind: input, shape index: {}]
  %s2 = inlined_call_operand.vmem [shape: f32[1,64], index: 2, kind: input, shape index: {}]
  %s3 = inlined_call_operand.vmem [shape: f32[64,32], index: 3, kind: input, shape index: {}]
  %s4 = inlined_call_operand.vmem [shape: f32[1,32], index: 4, kind: input, shape index: {}]
  %s5 = inlined_call_operand.hbm [shape: f32[16,32], index: 5, kind: output, shape index: {}]
  %s6 = sld [smem:[#allocation0]]
  $region42: #{tpu_custom_call.1} parent=0
    _
  %s8 = ssub.s32 1, %s6
  %s9 = scalar_select 0, %s8, %s6
  $region1: #{tpu_custom_call.1} parent=0
    #allocation3 [shape = 'u8[8192]{0}', space=vmem, size = 0x2000, scoped, tag = 'output window, operand 0, single buffered']
    #allocation4 [shape = 's32[1]{0}', space=sflag, size = 0x4, scoped, tag = 'scoped memory for tpu_custom_call.1']
    %10 = vsyncpa [#allocation4], 0
    // Predicated region
    $region2: #{tpu_custom_call.1} parent=1 // pred_check
      _
    $region3: #{tpu_custom_call.1} parent=1 // pred_check_branch
      %12 = sbr.rel (0) target = $region5
    $region4: #{tpu_custom_call.1} parent=1 // pred_region
      _
    $region5: #{tpu_custom_call.1} parent=1 // pred_fallthru
      _
    // Predicated region
    $region6: #{tpu_custom_call.1} parent=1 // pred_check
      _
    $region7: #{tpu_custom_call.1} parent=1 // pred_check_branch
      %14 = sbr.rel (0) target = $region9
    $region8: #{tpu_custom_call.1} parent=1 // pred_region
      _
    $region9: #{tpu_custom_call.1} parent=1 // pred_fallthru
      _
    // Predicated region
    $region10: #{tpu_custom_call.1} parent=1 // pred_check
      _
    $region11: #{tpu_custom_call.1} parent=1 // pred_check_branch
      %16 = sbr.rel (0) target = $region13
    $region12: #{tpu_custom_call.1} parent=1 // pred_region
      _
    $region13: #{tpu_custom_call.1} parent=1 // pred_fallthru
      _
    // Predicated region
    $region14: #{tpu_custom_call.1} parent=1 // pred_check
      _
    $region15: #{tpu_custom_call.1} parent=1 // pred_check_branch
      %18 = sbr.rel (0) target = $region17
    $region16: #{tpu_custom_call.1} parent=1 // pred_region
      _
    $region17: #{tpu_custom_call.1} parent=1 // pred_fallthru
      _
    // Predicated region
    $region18: #{tpu_custom_call.1} parent=1 // pred_check
      _
    $region19: #{tpu_custom_call.1} parent=1 // pred_check_branch
      %20 = sbr.rel (0) target = $region21
    $region20: #{tpu_custom_call.1} parent=1 // pred_region
      _
    $region21: #{tpu_custom_call.1} parent=1 // pred_fallthru
      _
    %v21 = vld [vmem:[%s0] sm:$0xff]
    %v22 = vld [vmem:[%s0 + $0x8] sm:$0xff]
    %v23 = vld [vmem:[%s1] sm:$0xff]
    %v24 = vld [vmem:[%s1 + $0x8] sm:$0xff]
    %v25 = vld [vmem:[%s1 + $0x10] sm:$0xff]
    %v26 = vld [vmem:[%s1 + $0x18] sm:$0xff]
    %v27 = vld [vmem:[%s2] sm:$0x1]
    %v29 = vperm.slane %v27, 0
    %vm31 = vcmask 261120
    %v33 = vsel %vm31, %v21, 0
    %v36 = vsel %vm31, %v22, 0
    %38 = vmatpush.msra.mxu0 0.0
    %39 = vmatpush.msra.mxu0 0.0
    %40 = vmatpush.msra.mxu0 0.0
    %41 = vmatpush.msra.mxu0 0.0
    %42 = vmatpush.msra.mxu0 0.0
    %43 = vmatpush.msra.mxu0 0.0
    %44 = vmatpush.msra.mxu0 0.0
    %45 = vmatpush.msra.mxu0 0.0
    %46 = vmatpush.msra.mxu0 0.0
    %47 = vmatpush.msra.mxu0 0.0
    %48 = vmatpush.msra.mxu0 0.0
    %49 = vmatpush.msra.mxu0 0.0
    %50 = vmatpush.msra.mxu0 %v26
    %51 = vmatpush.msra.mxu0 %v25
    %52 = vmatpush.msra.mxu0 %v24
    %53 = vmatpush.msra.mxu0 %v23
    %54 = vmatmul.f32.gmra.mxu0 %v33
    %v55 = vpop.f32.mrf.mxu0
    %v56 = vadd.f32 %v29, %v55
    %57 = vmatmul.f32.gmra.mxu0 %v36
    %v58 = vpop.f32.mrf.mxu0
    %v59 = vadd.f32 %v29, %v58
    %60 = vdwg.mxu0
    %v61 = vmax.f32 %v56, 0.0
    %v62 = vmax.f32 %v59, 0.0
    %v63 = vld [vmem:[%s3] sm:$0xff]
    %v64 = vld [vmem:[%s3 + $0x8] sm:$0xff]
    %v65 = vld [vmem:[%s3 + $0x10] sm:$0xff]
    %v66 = vld [vmem:[%s3 + $0x18] sm:$0xff]
    %v67 = vld [vmem:[%s3 + $0x20] sm:$0xff]
    %v68 = vld [vmem:[%s3 + $0x28] sm:$0xff]
    %v69 = vld [vmem:[%s3 + $0x30] sm:$0xff]
    %v70 = vld [vmem:[%s3 + $0x38] sm:$0xff]
    %vm71 = vcmask 523264
    %v73 = vsel %vm71, %v61, 0
    %v76 = vsel %vm71, %v62, 0
    %78 = vmatpush.msra.mxu0 0.0
    %79 = vmatpush.msra.mxu0 0.0
    %80 = vmatpush.msra.mxu0 0.0
    %81 = vmatpush.msra.mxu0 0.0
    %82 = vmatpush.msra.mxu0 0.0
    %83 = vmatpush.msra.mxu0 0.0
    %84 = vmatpush.msra.mxu0 0.0
    %85 = vmatpush.msra.mxu0 0.0
    %86 = vmatpush.msra.mxu0 %v70
    %87 = vmatpush.msra.mxu0 %v69
    %88 = vmatpush.msra.mxu0 %v68
    %89 = vmatpush.msra.mxu0 %v67
    %90 = vmatpush.msra.mxu0 %v66
    %91 = vmatpush.msra.mxu0 %v65
    %92 = vmatpush.msra.mxu0 %v64
    %93 = vmatpush.msra.mxu0 %v63
    %94 = vmatmul.f32.gmra.mxu0 %v73
    %v95 = vpop.f32.mrf.mxu0
    %v96 = vadd.f32 0.0, %v95
    %97 = vmatmul.f32.gmra.mxu0 %v76
    %v98 = vpop.f32.mrf.mxu0
    %v99 = vadd.f32 0.0, %v98
    %100 = vdwg.mxu0
    %p101 = scmp.eq.s32.totalorder 0, 0
    // Predicated region
    $region22: #{tpu_custom_call.1} parent=1 // pred_check
      %p102 = pneg %p101
    $region23: #{tpu_custom_call.1} parent=1 // pred_check_branch
      %104 = sbr.rel (%p102) target = $region25
    $region24: #{tpu_custom_call.1} parent=1 // pred_region
      %105 = vst.msk [vmem:[#allocation2] sm:$0xff] %vm31, %v96
      %106 = vst.msk [vmem:[#allocation2 + $0x8] sm:$0xff] %vm31, %v99
    $region25: #{tpu_custom_call.1} parent=1 // pred_fallthru
      _
    %p107 = scmp.gt.s32.totalorder 0, 0
    // Predicated region
    $region26: #{tpu_custom_call.1} parent=1 // pred_check
      %p108 = pneg %p107
    $region27: #{tpu_custom_call.1} parent=1 // pred_check_branch
      %110 = sbr.rel (%p108) target = $region29
    $region28: #{tpu_custom_call.1} parent=1 // pred_region
      %v111 = vld [vmem:[#allocation2] sm:$0xff]
      %v112 = vld [vmem:[#allocation2 + $0x8] sm:$0xff]
      %v113 = vadd.f32 %v111, %v96
      %v114 = vadd.f32 %v112, %v99
      %115 = vst.msk [vmem:[#allocation2] sm:$0xff] %vm31, %v113
      %116 = vst.msk [vmem:[#allocation2 + $0x8] sm:$0xff] %vm31, %v114
    $region29: #{tpu_custom_call.1} parent=1 // pred_fallthru
      _
    // Predicated region
    $region30: #{tpu_custom_call.1} parent=1 // pred_check
      %p117 = pneg %p101
    $region31: #{tpu_custom_call.1} parent=1 // pred_check_branch
      %119 = sbr.rel (%p117) target = $region33
    $region32: #{tpu_custom_call.1} parent=1 // pred_region
      %v120 = vld [vmem:[#allocation2] sm:$0xff]
      %v121 = vld [vmem:[#allocation2 + $0x8] sm:$0xff]
      %v122 = vld [vmem:[%s4] sm:$0x1]
      %v124 = vperm.slane %v122, 0
      %v126 = vadd.f32 %v120, %v124
      %v127 = vadd.f32 %v121, %v124
      %128 = vst.msk [vmem:[#allocation3] sm:$0xff] %vm31, %v126
      %129 = vst.msk [vmem:[#allocation3 + $0x8] sm:$0xff] %vm31, %v127
    $region33: #{tpu_custom_call.1} parent=1 // pred_fallthru
      _
    // Predicated region
    $region34: #{tpu_custom_call.1} parent=1 // pred_check
      _
    $region35: #{tpu_custom_call.1} parent=1 // pred_check_branch
      %131 = sbr.rel (0) target = $region37
    $region36: #{tpu_custom_call.1} parent=1 // pred_region
      %133 = vsyncadd [#allocation4], 0
      %s134 = sshll.u32 [#allocation3], 4
      %s135 = int_to_ptr.vmem [resolvable:$true] %s134
      %s136 = sshll.u32 %s5, 4
      %s137 = int_to_ptr.hbm [resolvable:$true] %s136
      %142 = dma.vmem_to_hbm [thread:$0]  %s135, 256, %s137, [#allocation4], 128, 128, 8
    $region37: #{tpu_custom_call.1} parent=1 // pred_fallthru
      _
    // Predicated region
    $region38: #{tpu_custom_call.1} parent=1 // pred_check
      _
    $region39: #{tpu_custom_call.1} parent=1 // pred_check_branch
      %144 = sbr.rel (0) target = $region41
    $region40: #{tpu_custom_call.1} parent=1 // pred_region
      %146 = dma.done [#allocation4], 256
    $region41: #{tpu_custom_call.1} parent=1 // pred_fallthru
      _
    %147 = vsyncpa [#allocation4], 1

</llo_original>
